<compile_context>
chip_gen: v6e
topology: v6e:2x2x1
jax: 0.10.0
libtpu: 0.0.40
codegen_flags: <defaults>
</compile_context>

<pallas_src>
import math

import jax
import jax.numpy as jnp
from jax import lax
from jax.experimental import pallas as pl
from jax.experimental.pallas import tpu as pltpu


def _round_up(x, m):
    return ((x + m - 1) // m) * m


def mf_forward(params, user_review, item_review, user_id, item_id,
               item_id_per_review, user_id_per_review, *, tb=512):
    """Pallas implementation of MF.forward. Returns shape [B] float32."""
    del user_review, item_review, item_id_per_review, user_id_per_review  # unused by MF

    user_emb = params["user_emb"].astype(jnp.float32)   # [Vu, D]
    item_emb = params["item_emb"].astype(jnp.float32)   # [Vi, D]
    Vu, D = user_emb.shape
    Vi = item_emb.shape[0]

    # Clamp ids (PyTorch would raise on OOB; clamping avoids an OOB DMA fault).
    uid = jnp.clip(user_id.reshape(-1).astype(jnp.int32), 0, Vu - 1)   # [B]
    iid = jnp.clip(item_id.reshape(-1).astype(jnp.int32), 0, Vi - 1)   # [B]
    B = uid.shape[0]

    # Batch tile: multiple of 128 (lane-dense), capped at `tb`; pad B up to it.
    TB = min(int(tb), max(128, int(pl.next_power_of_2(B))))
    TB = _round_up(TB, 128)
    Bp = _round_up(B, TB)
    n_tiles = Bp // TB

    uid_p = jnp.pad(uid, (0, Bp - B))     # padded rows gather row 0 (discarded)
    iid_p = jnp.pad(iid, (0, Bp - B))

    # Per-row biases: tiny, gather wrapper-side into lane-dense [1, Bp] slabs.
    bu_g = params["b_user"].astype(jnp.float32)[uid_p, 0].reshape(1, Bp)
    bi_g = params["b_item"].astype(jnp.float32)[iid_p, 0].reshape(1, Bp)

    w = params["lin_w"].reshape(1, D).astype(jnp.float32)   # [1, D], VMEM-resident
    b = params["lin_b"].reshape(1, 1).astype(jnp.float32)   # [1, 1] -> SMEM scalar

    def kernel(uid_ref, iid_ref,          # scalar prefetch (SMEM), whole id vectors
               ue_hbm, ie_hbm,            # embedding tables, stay in HBM (pl.ANY)
               bu_ref, bi_ref,            # [1, TB] gathered bias slabs
               w_ref, b_ref,              # [1, D] weight; SMEM scalar bias
               out_ref,                   # [1, TB] lane-dense output tile
               ue_buf, ie_buf, sem):      # [TB, D] gather scratch + DMA sems
        base = pl.program_id(0) * TB

        # Issue all 2*TB row-gather DMAs for this tile; they run concurrently.
        @pl.loop(0, TB)
        def _issue(r):
            u = uid_ref[base + r]
            it = iid_ref[base + r]
            pltpu.make_async_copy(ue_hbm.at[pl.ds(u, 1), :],
                                  ue_buf.at[pl.ds(r, 1), :], sem.at[0]).start()
            pltpu.make_async_copy(ie_hbm.at[pl.ds(it, 1), :],
                                  ie_buf.at[pl.ds(r, 1), :], sem.at[1]).start()

        # Drain: each wait consumes one row-sized completion per stream.
        @pl.loop(0, TB)
        def _wait(r):
            pltpu.make_async_copy(ue_hbm.at[pl.ds(0, 1), :],
                                  ue_buf.at[pl.ds(0, 1), :], sem.at[0]).wait()
            pltpu.make_async_copy(ie_hbm.at[pl.ds(0, 1), :],
                                  ie_buf.at[pl.ds(0, 1), :], sem.at[1]).wait()

        h = ue_buf[...] * ie_buf[...]                          # [TB, D] on the VPU
        # One MXU op per tile; lane-dense [1, TB] result.
        dot = lax.dot_general(w_ref[...], h,
                              dimension_numbers=(((1,), (1,)), ((), ())),
                              preferred_element_type=jnp.float32)
        out_ref[...] = dot + b_ref[0, 0] + bu_ref[...] + bi_ref[...]

    grid_spec = pltpu.PrefetchScalarGridSpec(
        num_scalar_prefetch=2,            # uid, iid -> SMEM
        grid=(n_tiles,),
        in_specs=[
            pl.BlockSpec(memory_space=pl.ANY),                     # user_emb (HBM)
            pl.BlockSpec(memory_space=pl.ANY),                     # item_emb (HBM)
            pl.BlockSpec((1, TB), lambda t, u, i: (0, t)),         # b_user slab
            pl.BlockSpec((1, TB), lambda t, u, i: (0, t)),         # b_item slab
            pl.BlockSpec((1, D), lambda t, u, i: (0, 0)),          # linear weight
            pl.BlockSpec(memory_space=pltpu.MemorySpace.SMEM),     # linear bias
        ],
        out_specs=pl.BlockSpec((1, TB), lambda t, u, i: (0, t)),
        scratch_shapes=[
            pltpu.VMEM((TB, D), jnp.float32),   # gathered user rows
            pltpu.VMEM((TB, D), jnp.float32),   # gathered item rows
            pltpu.SemaphoreType.DMA((2,)),      # one sem per gather stream
        ],
    )

    bytes_accessed = (2 * B * D * 4      # gathered embedding rows
                      + 2 * B * 4        # gathered bias slabs
                      + 2 * B * 4        # ids
                      + D * 4 + 4        # linear weight + bias
                      + B * 4)           # output
    out = pl.pallas_call(
        kernel,
        out_shape=jax.ShapeDtypeStruct((1, Bp), jnp.float32),
        grid_spec=grid_spec,
        compiler_params=pltpu.CompilerParams(
            dimension_semantics=("parallel",),   # batch tiles across TCs (v7x)
        ),
        cost_estimate=pl.CostEstimate(
            flops=3 * B * D, transcendentals=0, bytes_accessed=bytes_accessed),
    )(uid_p, iid_p, user_emb, item_emb, bu_g, bi_g, w, b)

    return out[0, :B]   # [B]


def init_params(key, user_num, item_num, embedding_dim):
    """Deterministic init mirroring init_weights (xavier_normal_ for Embedding /
    Linear weights, zero for Linear bias)."""
    k0, k1, k2, k3, k4 = jax.random.split(key, 5)

    def xavier_normal(k, shape):
        fan_out, fan_in = shape
        std = math.sqrt(2.0 / (fan_in + fan_out))
        return (std * jax.random.normal(k, shape)).astype(jnp.float32)

    return {
        "user_emb": xavier_normal(k0, (user_num + 1, embedding_dim)),
        "item_emb": xavier_normal(k1, (item_num + 1, embedding_dim)),
        "lin_w":    xavier_normal(k2, (1, embedding_dim)),   # nn.Linear(D, 1).weight
        "lin_b":    jnp.zeros((1,), jnp.float32),            # constant_(bias, 0)
        "b_user":   xavier_normal(k3, (user_num + 1, 1)),
        "b_item":   xavier_normal(k4, (item_num + 1, 1)),
    }


def mf_reference(params, user_id, item_id):
    """Pure-JAX reference for a correctness check."""
    uid = user_id.squeeze(-1)
    iid = item_id.squeeze(-1)
    h = params["user_emb"][uid] * params["item_emb"][iid]
    out = h @ params["lin_w"].T + params["lin_b"]                    # [B, 1]
    out = out + params["b_user"][uid] + params["b_item"][iid]
    return out.squeeze(-1)


if __name__ == "__main__":
    user_num, item_num, embedding_dim = 10, 20, 32
    batch = 8

    key = jax.random.PRNGKey(0)
    pkey, ukey, ikey = jax.random.split(key, 3)
    params = init_params(pkey, user_num, item_num, embedding_dim)

    user_id = jax.random.randint(ukey, (batch, 1), 0, user_num + 1, dtype=jnp.int32)
    item_id = jax.random.randint(ikey, (batch, 1), 0, item_num + 1, dtype=jnp.int32)

    # user_review / item_review / *_per_review are accepted but unused by MF.forward.
    user_review = jnp.zeros((batch, 4), jnp.int32)
    item_review = jnp.zeros((batch, 4), jnp.int32)
    item_id_per_review = jnp.zeros((batch, 4), jnp.int32)
    user_id_per_review = jnp.zeros((batch, 4), jnp.int32)

    out = mf_forward(params, user_review, item_review, user_id, item_id,
                     item_id_per_review, user_id_per_review)
    out = jax.block_until_ready(out)

    ref = mf_reference(params, user_id, item_id)
    assert out.shape == (batch,)
    assert jnp.allclose(out, ref, atol=1e-5, rtol=1e-5), (out, ref)

    print("KERNEL_OK")
</pallas_src>

<mosaic_0001>
module attributes {stable_mosaic.version = 11 : i64} {
  func.func @kernel(%arg0: i32, %arg1: memref<128xi32, #tpu.memory_space<smem>>, %arg2: memref<128xi32, #tpu.memory_space<smem>>, %arg3: memref<11x32xf32, #tpu.memory_space<any>>, %arg4: memref<21x32xf32, #tpu.memory_space<any>>, %arg5: memref<1x128xf32, #tpu.memory_space<vmem>>, %arg6: memref<1x128xf32, #tpu.memory_space<vmem>>, %arg7: memref<1x32xf32, #tpu.memory_space<vmem>>, %arg8: memref<1x1xf32, #tpu.memory_space<smem>>, %arg9: memref<1x128xf32, #tpu.memory_space<vmem>>, %arg10: memref<128x32xf32, #tpu.memory_space<vmem>>, %arg11: memref<128x32xf32, #tpu.memory_space<vmem>>, %arg12: memref<2x!tpu.dma_semaphore, #tpu.memory_space<semaphore_mem>>) attributes {dimension_semantics = [#tpu.dimension_semantics<parallel>], iteration_bounds = array<i64: 1>, scalar_prefetch = 2 : i64, scratch_operands = 3 : i64, tpu.core_type = #tpu.core_type<tc>, window_params = [{}, {}, {transform_indices = @transform_2, window_bounds = array<i64: 1, 128>}, {transform_indices = @transform_3, window_bounds = array<i64: 1, 128>}, {pipeline_mode = #tpu.pipeline_mode<synchronous>, transform_indices = @transform_4, window_bounds = array<i64: 1, 32>}, {transform_indices = @transform_5, window_bounds = array<i64: 1, 1>}, {transform_indices = @transform_6, window_bounds = array<i64: 1, 128>}]} {
    %c128_i32 = arith.constant 128 : i32
    %0 = arith.muli %arg0, %c128_i32 : i32
    %c0_i32 = arith.constant 0 : i32
    %c128_i32_0 = arith.constant 128 : i32
    %1 = arith.addi %c0_i32, %c128_i32_0 : i32
    %c1_i32 = arith.constant 1 : i32
    scf.for %arg13 = %c0_i32 to %1 step %c1_i32  : i32 {
      %c1_i32_18 = arith.constant 1 : i32
      %16 = arith.muli %arg13, %c1_i32_18 : i32
      %c0_i32_19 = arith.constant 0 : i32
      %17 = arith.addi %c0_i32_19, %16 : i32
      %18 = arith.addi %0, %17 : i32
      %19 = arith.index_cast %18 : i32 to index
      %20 = memref.load %arg1[%19] : memref<128xi32, #tpu.memory_space<smem>>
      %21 = arith.addi %0, %17 : i32
      %22 = arith.index_cast %21 : i32 to index
      %23 = memref.load %arg2[%22] : memref<128xi32, #tpu.memory_space<smem>>
      %c0_i32_20 = arith.constant 0 : i32
      %c0_i32_21 = arith.constant 0 : i32
      %24 = tpu.memref_slice %arg3[%20, %c0_i32_21] : memref<11x32xf32, #tpu.memory_space<any>> -> memref<1x32xf32, #tpu.memory_space<any>>
      %c0_i32_22 = arith.constant 0 : i32
      %25 = tpu.memref_slice %arg10[%17, %c0_i32_22] : memref<128x32xf32, #tpu.memory_space<vmem>> -> memref<1x32xf32, #tpu.memory_space<vmem>>
      %26 = tpu.memref_slice %arg12[%c0_i32_20] : memref<2x!tpu.dma_semaphore, #tpu.memory_space<semaphore_mem>> -> memref<1x!tpu.dma_semaphore, #tpu.memory_space<semaphore_mem>>
      %27 = tpu.memref_squeeze %26 : memref<1x!tpu.dma_semaphore, #tpu.memory_space<semaphore_mem>> -> memref<!tpu.dma_semaphore, #tpu.memory_space<semaphore_mem>>
      tpu.enqueue_dma source(%24 : memref<1x32xf32, #tpu.memory_space<any>>) target(%25 : memref<1x32xf32, #tpu.memory_space<vmem>>) target_semaphore(%27 : memref<!tpu.dma_semaphore, #tpu.memory_space<semaphore_mem>>)
      %c1_i32_23 = arith.constant 1 : i32
      %c0_i32_24 = arith.constant 0 : i32
      %28 = tpu.memref_slice %arg4[%23, %c0_i32_24] : memref<21x32xf32, #tpu.memory_space<any>> -> memref<1x32xf32, #tpu.memory_space<any>>
      %c0_i32_25 = arith.constant 0 : i32
      %29 = tpu.memref_slice %arg11[%17, %c0_i32_25] : memref<128x32xf32, #tpu.memory_space<vmem>> -> memref<1x32xf32, #tpu.memory_space<vmem>>
      %30 = tpu.memref_slice %arg12[%c1_i32_23] : memref<2x!tpu.dma_semaphore, #tpu.memory_space<semaphore_mem>> -> memref<1x!tpu.dma_semaphore, #tpu.memory_space<semaphore_mem>>
      %31 = tpu.memref_squeeze %30 : memref<1x!tpu.dma_semaphore, #tpu.memory_space<semaphore_mem>> -> memref<!tpu.dma_semaphore, #tpu.memory_space<semaphore_mem>>
      tpu.enqueue_dma source(%28 : memref<1x32xf32, #tpu.memory_space<any>>) target(%29 : memref<1x32xf32, #tpu.memory_space<vmem>>) target_semaphore(%31 : memref<!tpu.dma_semaphore, #tpu.memory_space<semaphore_mem>>)
    }
    %c128_i32_1 = arith.constant 128 : i32
    %c0_i32_2 = arith.constant 0 : i32
    %c128_i32_3 = arith.constant 128 : i32
    %2 = arith.addi %c0_i32_2, %c128_i32_3 : i32
    %c1_i32_4 = arith.constant 1 : i32
    scf.for %arg13 = %c0_i32_2 to %2 step %c1_i32_4  : i32 {
      %c0_i32_18 = arith.constant 0 : i32
      %c0_i32_19 = arith.constant 0 : i32
      %c0_i32_20 = arith.constant 0 : i32
      %16 = tpu.memref_slice %arg3[%c0_i32_19, %c0_i32_20] : memref<11x32xf32, #tpu.memory_space<any>> -> memref<1x32xf32, #tpu.memory_space<any>>
      %c0_i32_21 = arith.constant 0 : i32
      %c0_i32_22 = arith.constant 0 : i32
      %17 = tpu.memref_slice %arg10[%c0_i32_21, %c0_i32_22] : memref<128x32xf32, #tpu.memory_space<vmem>> -> memref<1x32xf32, #tpu.memory_space<vmem>>
      %18 = tpu.memref_slice %arg12[%c0_i32_18] : memref<2x!tpu.dma_semaphore, #tpu.memory_space<semaphore_mem>> -> memref<1x!tpu.dma_semaphore, #tpu.memory_space<semaphore_mem>>
      %19 = tpu.memref_squeeze %18 : memref<1x!tpu.dma_semaphore, #tpu.memory_space<semaphore_mem>> -> memref<!tpu.dma_semaphore, #tpu.memory_space<semaphore_mem>>
      tpu.wait_dma2 semaphore(%19 : memref<!tpu.dma_semaphore, #tpu.memory_space<semaphore_mem>>) src(%16 : memref<1x32xf32, #tpu.memory_space<any>>) dst(%17 : memref<1x32xf32, #tpu.memory_space<vmem>>)
      %c1_i32_23 = arith.constant 1 : i32
      %c0_i32_24 = arith.constant 0 : i32
      %c0_i32_25 = arith.constant 0 : i32
      %20 = tpu.memref_slice %arg4[%c0_i32_24, %c0_i32_25] : memref<21x32xf32, #tpu.memory_space<any>> -> memref<1x32xf32, #tpu.memory_space<any>>
      %c0_i32_26 = arith.constant 0 : i32
      %c0_i32_27 = arith.constant 0 : i32
      %21 = tpu.memref_slice %arg11[%c0_i32_26, %c0_i32_27] : memref<128x32xf32, #tpu.memory_space<vmem>> -> memref<1x32xf32, #tpu.memory_space<vmem>>
      %22 = tpu.memref_slice %arg12[%c1_i32_23] : memref<2x!tpu.dma_semaphore, #tpu.memory_space<semaphore_mem>> -> memref<1x!tpu.dma_semaphore, #tpu.memory_space<semaphore_mem>>
      %23 = tpu.memref_squeeze %22 : memref<1x!tpu.dma_semaphore, #tpu.memory_space<semaphore_mem>> -> memref<!tpu.dma_semaphore, #tpu.memory_space<semaphore_mem>>
      tpu.wait_dma2 semaphore(%23 : memref<!tpu.dma_semaphore, #tpu.memory_space<semaphore_mem>>) src(%20 : memref<1x32xf32, #tpu.memory_space<any>>) dst(%21 : memref<1x32xf32, #tpu.memory_space<vmem>>)
    }
    %c0 = arith.constant 0 : index
    %c0_5 = arith.constant 0 : index
    %3 = vector.load %arg10[%c0, %c0_5] : memref<128x32xf32, #tpu.memory_space<vmem>>, vector<128x32xf32>
    %c0_6 = arith.constant 0 : index
    %c0_7 = arith.constant 0 : index
    %4 = vector.load %arg11[%c0_6, %c0_7] : memref<128x32xf32, #tpu.memory_space<vmem>>, vector<128x32xf32>
    %5 = arith.mulf %3, %4 : vector<128x32xf32>
    %c0_8 = arith.constant 0 : index
    %c0_9 = arith.constant 0 : index
    %6 = vector.load %arg7[%c0_8, %c0_9] : memref<1x32xf32, #tpu.memory_space<vmem>>, vector<1x32xf32>
    %cst = arith.constant dense<0.000000e+00> : vector<1x128xf32>
    %7 = tpu.matmul %6, %5, %cst {dimension_numbers = #tpu.dot_dimension_numbers<[1], [1], [0], [0], [0, 0, 1, 0], [], []>} : vector<1x32xf32>, vector<128x32xf32>, vector<1x128xf32> -> vector<1x128xf32>
    %c0_10 = arith.constant 0 : index
    %c0_11 = arith.constant 0 : index
    %8 = memref.load %arg8[%c0_10, %c0_11] : memref<1x1xf32, #tpu.memory_space<smem>>
    %9 = vector.broadcast %8 : f32 to vector<1x128xf32>
    %10 = arith.addf %7, %9 : vector<1x128xf32>
    %c0_12 = arith.constant 0 : index
    %c0_13 = arith.constant 0 : index
    %11 = vector.load %arg5[%c0_12, %c0_13] : memref<1x128xf32, #tpu.memory_space<vmem>>, vector<1x128xf32>
    %12 = arith.addf %10, %11 : vector<1x128xf32>
    %c0_14 = arith.constant 0 : index
    %c0_15 = arith.constant 0 : index
    %13 = vector.load %arg6[%c0_14, %c0_15] : memref<1x128xf32, #tpu.memory_space<vmem>>, vector<1x128xf32>
    %14 = arith.addf %12, %13 : vector<1x128xf32>
    %c0_16 = arith.constant 0 : index
    %c0_17 = arith.constant 0 : index
    %15 = vector.load %arg9[%c0_16, %c0_17] : memref<1x128xf32, #tpu.memory_space<vmem>>, vector<1x128xf32>
    tpu.vector_store %arg9[%c0_16, %c0_17], %14 {strides = array<i32>} : memref<1x128xf32, #tpu.memory_space<vmem>>, vector<1x128xf32>,
    return
  }
  func.func @transform_2(%arg0: i32, %arg1: memref<128xi32, #tpu.memory_space<smem>>, %arg2: memref<128xi32, #tpu.memory_space<smem>>) -> (i32, i32) {
    %c0_i32 = arith.constant 0 : i32
    %c0_i32_0 = arith.constant 0 : i32
    return %c0_i32, %arg0 : i32, i32
  }
  func.func @transform_3(%arg0: i32, %arg1: memref<128xi32, #tpu.memory_space<smem>>, %arg2: memref<128xi32, #tpu.memory_space<smem>>) -> (i32, i32) {
    %c0_i32 = arith.constant 0 : i32
    %c0_i32_0 = arith.constant 0 : i32
    return %c0_i32, %arg0 : i32, i32
  }
  func.func @transform_4(%arg0: i32, %arg1: memref<128xi32, #tpu.memory_space<smem>>, %arg2: memref<128xi32, #tpu.memory_space<smem>>) -> (i32, i32) {
    %c0_i32 = arith.constant 0 : i32
    %c0_i32_0 = arith.constant 0 : i32
    %c0_i32_1 = arith.constant 0 : i32
    return %c0_i32, %c0_i32_0 : i32, i32
  }
  func.func @transform_5(%arg0: i32, %arg1: memref<128xi32, #tpu.memory_space<smem>>, %arg2: memref<128xi32, #tpu.memory_space<smem>>) -> (i32, i32) {
    %c0_i32 = arith.constant 0 : i32
    %c0_i32_0 = arith.constant 0 : i32
    %c0_i32_1 = arith.constant 0 : i32
    return %c0_i32, %c0_i32_0 : i32, i32
  }
  func.func @transform_6(%arg0: i32, %arg1: memref<128xi32, #tpu.memory_space<smem>>, %arg2: memref<128xi32, #tpu.memory_space<smem>>) -> (i32, i32) {
    %c0_i32 = arith.constant 0 : i32
    %c0_i32_0 = arith.constant 0 : i32
    return %c0_i32, %arg0 : i32, i32
  }
}

</mosaic_0001>

<llo_original>
// kernel: tpu_custom_call.1
$region0: #{tpu_custom_call.1}
  #allocation0 [shape = 'u32[]', space=smem, size = 0x4, offset = 0x4, fixed_abs, tag = 'smem constant byte address 0x4 - core index']
  #allocation1 [shape = 'u32[144,128]{1,0:T(1,128)}', space=vmem, size = 0x12000, scoped, tag = 'internal scratch']
  #allocation2 [shape = 'f32[128,32]{1,0:T(8,128)}', space=vmem, size = 0x10000, scoped, tag = 'scratch operand']
  #allocation3 [shape = 'f32[128,32]{1,0:T(8,128)}', space=vmem, size = 0x10000, scoped, tag = 'scratch operand']
  #allocation4 [shape = 's32[2]{0}', space=sflag, size = 0x8, scoped, tag = 'scratch operand']
  #allocation5 [shape = 's32[1]{0}', space=sflag, size = 0x4, scoped, tag = 'scoped memory for tpu_custom_call.1']
  #allocation6 [shape = 'u8[512]{0}', space=smem, size = 0x200, scoped, tag = 'prefetched SMEM operand 0']
  #allocation7 [shape = 'u8[512]{0}', space=smem, size = 0x200, scoped, tag = 'prefetched SMEM operand 1']
  #allocation8 [shape = 'f32[1,1]{1,0:T(1,128)S(6)}', space=smem, size = 0x200, scoped, tag = 'scoped memory for tpu_custom_call.1']
  #allocation11 [shape = 's32[]', space=sflag, size = 0x4, offset = 0, fixed_abs, tag = 'sflag constant byte address 0x0 - dummy sync flag']
  #allocation12 [shape = 's32[]', space=sflag, size = 0x4, offset = 0, fixed_abs, tag = 'sflag constant byte address 0x0 - dummy sync flag']
  #allocation13 [shape = 'u32[]', space=smem, size = 0x4, offset = 0x44, fixed_abs, tag = 'smem constant byte address 0x44 - assertion arg 0']
  #allocation14 [shape = 'u32[]', space=smem, size = 0x4, offset = 0x48, fixed_abs, tag = 'smem constant byte address 0x48 - assertion arg 1']
  #allocation15 [shape = 's32[]', space=sflag, size = 0x4, offset = 0, fixed_abs, tag = 'sflag constant byte address 0x0 - dummy sync flag']
  #allocation16 [shape = 's32[]', space=sflag, size = 0x4, offset = 0, fixed_abs, tag = 'sflag constant byte address 0x0 - dummy sync flag']
  %s0 = inlined_call_operand.vmem [shape: s32[128], index: 0, kind: input, shape index: {}]
  %s1 = inlined_call_operand.vmem [shape: s32[128], index: 1, kind: input, shape index: {}]
  %s2 = inlined_call_operand.hbm [shape: f32[11,32], index: 2, kind: input, shape index: {}]
  %s3 = inlined_call_operand.hbm [shape: f32[21,32], index: 3, kind: input, shape index: {}]
  %s4 = inlined_call_operand.vmem [shape: f32[1,128], index: 4, kind: input, shape index: {}]
  %s5 = inlined_call_operand.vmem [shape: f32[1,128], index: 5, kind: input, shape index: {}]
  %s6 = inlined_call_operand.vmem [shape: f32[1,32], index: 6, kind: input, shape index: {}]
  %s7 = inlined_call_operand.<no memory space> [shape: f32[1,1], index: 7, kind: input, shape index: {}]
  %s8 = inlined_call_operand.hbm [shape: f32[1,128], index: 8, kind: output, shape index: {}]
  %s9 = sld [smem:[#allocation0]]
  $region48: #{tpu_custom_call.1} parent=0
    _
  %s11 = ssub.s32 1, %s9
  %s12 = scalar_select 0, %s11, %s9
  %s13 = sshll.u32 %s0, 4
  %s14 = int_to_ptr.vmem [resolvable:$true] %s13
  %16 = dma.vmem_to_smem %s14, 16, [#allocation6], [#allocation5]
  %s17 = sshll.u32 %s1, 4
  %s18 = int_to_ptr.vmem [resolvable:$true] %s17
  %20 = dma.vmem_to_smem %s18, 16, [#allocation7], [#allocation5]
  %21 = sst [smem:[#allocation8]] %s7
  %22 = dma.done [#allocation5], 32
  %23 = sfence
  $region1: #{tpu_custom_call.1} parent=0
    #allocation9 [shape = 'u8[512]{0}', space=vmem, size = 0x400, scoped, tag = 'output window, operand 0, single buffered']
    #allocation10 [shape = 's32[1]{0}', space=sflag, size = 0x4, scoped, tag = 'scoped memory for tpu_custom_call.1']
    %24 = vsyncpa [#allocation10], 0
    // Predicated region
    $region2: #{tpu_custom_call.1} parent=1 // pred_check
      _
    $region3: #{tpu_custom_call.1} parent=1 // pred_check_branch
      %26 = sbr.rel (0) target = $region5
    $region4: #{tpu_custom_call.1} parent=1 // pred_region
      _
    $region5: #{tpu_custom_call.1} parent=1 // pred_fallthru
      _
    // Predicated region
    $region6: #{tpu_custom_call.1} parent=1 // pred_check
      _
    $region7: #{tpu_custom_call.1} parent=1 // pred_check_branch
      %28 = sbr.rel (0) target = $region9
    $region8: #{tpu_custom_call.1} parent=1 // pred_region
      _
    $region9: #{tpu_custom_call.1} parent=1 // pred_fallthru
      _
    // Predicated region
    $region10: #{tpu_custom_call.1} parent=1 // pred_check
      _
    $region11: #{tpu_custom_call.1} parent=1 // pred_check_branch
      %30 = sbr.rel (0) target = $region13
    $region12: #{tpu_custom_call.1} parent=1 // pred_region
      _
    $region13: #{tpu_custom_call.1} parent=1 // pred_fallthru
      _
    // Predicated region
    $region14: #{tpu_custom_call.1} parent=1 // pred_check
      _
    $region15: #{tpu_custom_call.1} parent=1 // pred_check_branch
      %32 = sbr.rel (0) target = $region17
    $region16: #{tpu_custom_call.1} parent=1 // pred_region
      _
    $region17: #{tpu_custom_call.1} parent=1 // pred_fallthru
      _
    %s33 = smul.u32 0, 128
    loop: start=0, step=1, limit=128
    $region18: #{tpu_custom_call.1} parent=1 // loop_pre_header
      _
    $region19: #{tpu_custom_call.1} parent=1 // loop_header
      %s35 = sphi 0, %s39
      %p36 = scmp.ge.s32.totalorder %s35, 128
    $region20: #{tpu_custom_call.1} parent=1 // loop_header_branch
      %38 = sbr.rel (%p36) target = $region24
    $region21: #{tpu_custom_call.1} parent=1 // loop_body
      %s40 = sadd.s32 %s33, %s35
      %s41 = sld [smem:[#allocation6 + %s40]]
      %s42 = sld [smem:[#allocation7 + %s40]]
      %s43 = smul.addr %s41, 16
      %s44 = scalar_lea.hbm %s2, %s43
      %s45 = scalar_lea.vmem [#allocation2], %s35
      // Predicated region
      $region25: #{tpu_custom_call.1} parent=21 // pred_check
        _
      $region26: #{tpu_custom_call.1} parent=21 // pred_check_branch
        %47 = sbr.rel target = $region28
      $region27: #{tpu_custom_call.1} parent=21 // pred_region
        %48 = sst [smem:[#allocation13]] [#allocation12]
        %49 = sst [smem:[#allocation14]] [#allocation11]
      $region28: #{tpu_custom_call.1} parent=21 // pred_fallthru
        _
      %51 = shalt.err (0)
      %s53 = sshll.u32 %s45, 4
      %s54 = int_to_ptr.vmem [resolvable:$true] %s53
      %56 = dma.hbm_to_vmem [thread:$0]  %s44, 16, %s54, [#allocation4]
      %s57 = smul.addr %s42, 16
      %s58 = scalar_lea.hbm %s3, %s57
      %s59 = scalar_lea.vmem [#allocation3], %s35
      %s60 = scalar_lea.sflag [#allocation4], 1
      // Predicated region
      $region29: #{tpu_custom_call.1} parent=21 // pred_check
        _
      $region30: #{tpu_custom_call.1} parent=21 // pred_check_branch
        %62 = sbr.rel target = $region32
      $region31: #{tpu_custom_call.1} parent=21 // pred_region
        %63 = sst [smem:[#allocation13]] [#allocation16]
        %64 = sst [smem:[#allocation14]] [#allocation15]
      $region32: #{tpu_custom_call.1} parent=21 // pred_fallthru
        _
      %66 = shalt.err (0)
      %s68 = sshll.u32 %s59, 4
      %s69 = int_to_ptr.vmem [resolvable:$true] %s68
      %71 = dma.hbm_to_vmem [thread:$0]  %s58, 16, %s69, %s60
    $region22: #{tpu_custom_call.1} parent=1 // loop_footer
      %s39 = sadd.s32 1, %s35
    $region23: #{tpu_custom_call.1} parent=1 // loop_footer_branch
      %34 = sbr.rel target = $region19
    $region24: #{tpu_custom_call.1} parent=1 // loop_exit
      _
    loop: start=0, step=1, limit=128
    $region33: #{tpu_custom_call.1} parent=1 // loop_pre_header
      _
    $region34: #{tpu_custom_call.1} parent=1 // loop_header
      %s73 = sphi 0, %s77
      %p74 = scmp.ge.s32.totalorder %s73, 128
    $region35: #{tpu_custom_call.1} parent=1 // loop_header_branch
      %76 = sbr.rel (%p74) target = $region39
    $region36: #{tpu_custom_call.1} parent=1 // loop_body
      %s78 = smul.u32 1, 1
      %s79 = sshll.u32 %s78, 4
      %80 = dma.done [#allocation4], %s79
      %s81 = scalar_lea.sflag [#allocation4], 1
      %s82 = sshll.u32 %s78, 4
      %83 = dma.done %s81, %s82
    $region37: #{tpu_custom_call.1} parent=1 // loop_footer
      %s77 = sadd.s32 1, %s73
    $region38: #{tpu_custom_call.1} parent=1 // loop_footer_branch
      %72 = sbr.rel target = $region34
    $region39: #{tpu_custom_call.1} parent=1 // loop_exit
      _
    %v84 = vld [vmem:[#allocation2] sm:$0xff]
    %v85 = vld [vmem:[#allocation2 + $0x8] sm:$0xff]
    %v86 = vld [vmem:[#allocation2 + $0x10] sm:$0xff]
    %v87 = vld [vmem:[#allocation2 + $0x18] sm:$0xff]
    %v88 = vld [vmem:[#allocation2 + $0x20] sm:$0xff]
    %v89 = vld [vmem:[#allocation2 + $0x28] sm:$0xff]
    %v90 = vld [vmem:[#allocation2 + $0x30] sm:$0xff]
    %v91 = vld [vmem:[#allocation2 + $0x38] sm:$0xff]
    %v92 = vld [vmem:[#allocation2 + $0x40] sm:$0xff]
    %v93 = vld [vmem:[#allocation2 + $0x48] sm:$0xff]
    %v94 = vld [vmem:[#allocation2 + $0x50] sm:$0xff]
    %v95 = vld [vmem:[#allocation2 + $0x58] sm:$0xff]
    %v96 = vld [vmem:[#allocation2 + $0x60] sm:$0xff]
    %v97 = vld [vmem:[#allocation2 + $0x68] sm:$0xff]
    %v98 = vld [vmem:[#allocation2 + $0x70] sm:$0xff]
    %v99 = vld [vmem:[#allocation2 + $0x78] sm:$0xff]
    %v100 = vld [vmem:[#allocation3] sm:$0xff]
    %v101 = vld [vmem:[#allocation3 + $0x8] sm:$0xff]
    %v102 = vld [vmem:[#allocation3 + $0x10] sm:$0xff]
    %v103 = vld [vmem:[#allocation3 + $0x18] sm:$0xff]
    %v104 = vld [vmem:[#allocation3 + $0x20] sm:$0xff]
    %v105 = vld [vmem:[#allocation3 + $0x28] sm:$0xff]
    %v106 = vld [vmem:[#allocation3 + $0x30] sm:$0xff]
    %v107 = vld [vmem:[#allocation3 + $0x38] sm:$0xff]
    %v108 = vld [vmem:[#allocation3 + $0x40] sm:$0xff]
    %v109 = vld [vmem:[#allocation3 + $0x48] sm:$0xff]
    %v110 = vld [vmem:[#allocation3 + $0x50] sm:$0xff]
    %v111 = vld [vmem:[#allocation3 + $0x58] sm:$0xff]
    %v112 = vld [vmem:[#allocation3 + $0x60] sm:$0xff]
    %v113 = vld [vmem:[#allocation3 + $0x68] sm:$0xff]
    %v114 = vld [vmem:[#allocation3 + $0x70] sm:$0xff]
    %v115 = vld [vmem:[#allocation3 + $0x78] sm:$0xff]
    %v116 = vmul.f32 %v84, %v100
    %v117 = vmul.f32 %v85, %v101
    %v118 = vmul.f32 %v86, %v102
    %v119 = vmul.f32 %v87, %v103
    %v120 = vmul.f32 %v88, %v104
    %v121 = vmul.f32 %v89, %v105
    %v122 = vmul.f32 %v90, %v106
    %v123 = vmul.f32 %v91, %v107
    %v124 = vmul.f32 %v92, %v108
    %v125 = vmul.f32 %v93, %v109
    %v126 = vmul.f32 %v94, %v110
    %v127 = vmul.f32 %v95, %v111
    %v128 = vmul.f32 %v96, %v112
    %v129 = vmul.f32 %v97, %v113
    %v130 = vmul.f32 %v98, %v114
    %v131 = vmul.f32 %v99, %v115
    %v132 = vld [vmem:[%s6] sm:$0x1]
    %s133 = sld [smem:[#allocation8]]
    %v134 = vstv %s133
    %vm135 = vcmask 261120
    %v137 = vsel %vm135, %v132, 0
    %v140 = vsel %vm135, %v116, 0
    %v143 = vsel %vm135, %v117, 0
    %v146 = vsel %vm135, %v118, 0
    %v149 = vsel %vm135, %v119, 0
    %v152 = vsel %vm135, %v120, 0
    %v155 = vsel %vm135, %v121, 0
    %v158 = vsel %vm135, %v122, 0
    %v161 = vsel %vm135, %v123, 0
    %v164 = vsel %vm135, %v124, 0
    %v167 = vsel %vm135, %v125, 0
    %v170 = vsel %vm135, %v126, 0
    %v173 = vsel %vm135, %v127, 0
    %v176 = vsel %vm135, %v128, 0
    %v179 = vsel %vm135, %v129, 0
    %v182 = vsel %vm135, %v130, 0
    %v185 = vsel %vm135, %v131, 0
    %187 = vmatprep.subr.mxu0 0.0
    %188 = vmatpush1.xpose.msra.mxu0 %v185
    %189 = vmatprep.subr.mxu0 0.0
    %190 = vmatpush1.xpose.msra.mxu0 %v182
    %191 = vmatprep.subr.mxu0 0.0
    %192 = vmatpush1.xpose.msra.mxu0 %v179
    %193 = vmatprep.subr.mxu0 0.0
    %194 = vmatpush1.xpose.msra.mxu0 %v176
    %195 = vmatprep.subr.mxu0 0.0
    %196 = vmatpush1.xpose.msra.mxu0 %v173
    %197 = vmatprep.subr.mxu0 0.0
    %198 = vmatpush1.xpose.msra.mxu0 %v170
    %199 = vmatprep.subr.mxu0 0.0
    %200 = vmatpush1.xpose.msra.mxu0 %v167
    %201 = vmatprep.subr.mxu0 0.0
    %202 = vmatpush1.xpose.msra.mxu0 %v164
    %203 = vmatprep.subr.mxu0 0.0
    %204 = vmatpush1.xpose.msra.mxu0 %v161
    %205 = vmatprep.subr.mxu0 0.0
    %206 = vmatpush1.xpose.msra.mxu0 %v158
    %207 = vmatprep.subr.mxu0 0.0
    %208 = vmatpush1.xpose.msra.mxu0 %v155
    %209 = vmatprep.subr.mxu0 0.0
    %210 = vmatpush1.xpose.msra.mxu0 %v152
    %211 = vmatprep.subr.mxu0 0.0
    %212 = vmatpush1.xpose.msra.mxu0 %v149
    %213 = vmatprep.subr.mxu0 0.0
    %214 = vmatpush1.xpose.msra.mxu0 %v146
    %215 = vmatprep.subr.mxu0 0.0
    %216 = vmatpush1.xpose.msra.mxu0 %v143
    %217 = vmatprep.subr.mxu0 0.0
    %218 = vmatpush1.xpose.msra.mxu0 %v140
    %219 = vmatprep.subr.mxu0 0.0
    %220 = vmatpush2.xpose.msra.mxu0 0.0
    %221 = vmatprep.subr.mxu0 0.0
    %222 = vmatpush2.xpose.msra.mxu0 0.0
    %223 = vmatprep.subr.mxu0 0.0
    %224 = vmatpush2.xpose.msra.mxu0 0.0
    %225 = vmatprep.subr.mxu0 0.0
    %226 = vmatpush2.xpose.msra.mxu0 0.0
    %227 = vmatprep.subr.mxu0 0.0
    %228 = vmatpush2.xpose.msra.mxu0 0.0
    %229 = vmatprep.subr.mxu0 0.0
    %230 = vmatpush2.xpose.msra.mxu0 0.0
    %231 = vmatprep.subr.mxu0 0.0
    %232 = vmatpush2.xpose.msra.mxu0 0.0
    %233 = vmatprep.subr.mxu0 0.0
    %234 = vmatpush2.xpose.msra.mxu0 0.0
    %235 = vmatprep.subr.mxu0 0.0
    %236 = vmatpush2.xpose.msra.mxu0 0.0
    %237 = vmatprep.subr.mxu0 0.0
    %238 = vmatpush2.xpose.msra.mxu0 0.0
    %239 = vmatprep.subr.mxu0 0.0
    %240 = vmatpush2.xpose.msra.mxu0 0.0
    %241 = vmatprep.subr.mxu0 0.0
    %242 = vmatpush2.xpose.msra.mxu0 0.0
    %243 = vmatprep.subr.mxu0 0.0
    %244 = vmatpush2.xpose.msra.mxu0 0.0
    %245 = vmatprep.subr.mxu0 0.0
    %246 = vmatpush2.xpose.msra.mxu0 0.0
    %247 = vmatprep.subr.mxu0 0.0
    %248 = vmatpush2.xpose.msra.mxu0 0.0
    %249 = vmatprep.subr.mxu0 0.0
    %250 = vmatpush2.xpose.msra.mxu0 0.0
    %251 = vmatprep.mubr.f32.mxu0 0.0
    %252 = vmatmul.mubr.f32.gmra.mxu0 %v137
    %v253 = vpop.f32.mrf.mxu0
    %v254 = vadd.f32 %v134, %v253
    %v255 = vpop.f32.mrf.mxu0
    %256 = vdwg.mxu0
    %v257 = vld [vmem:[%s4] sm:$0x1]
    %v258 = vadd.f32 %v254, %v257
    %v259 = vld [vmem:[%s5] sm:$0x1]
    %v260 = vadd.f32 %v258, %v259
    %261 = vst [vmem:[#allocation9] sm:$0x1] %v260
    // Predicated region
    $region40: #{tpu_custom_call.1} parent=1 // pred_check
      _
    $region41: #{tpu_custom_call.1} parent=1 // pred_check_branch
      %263 = sbr.rel (0) target = $region43
    $region42: #{tpu_custom_call.1} parent=1 // pred_region
      %s265 = ssub.s32 16, 16
      %266 = vsyncadd [#allocation10], %s265
      %s268 = sshll.u32 [#allocation9], 4
      %s269 = int_to_ptr.vmem [resolvable:$true] %s268
      %271 = dma.vmem_to_hbm [thread:$0]  %s269, 16, %s8, [#allocation10]
    $region43: #{tpu_custom_call.1} parent=1 // pred_fallthru
      _
    // Predicated region
    $region44: #{tpu_custom_call.1} parent=1 // pred_check
      _
    $region45: #{tpu_custom_call.1} parent=1 // pred_check_branch
      %273 = sbr.rel (0) target = $region47
    $region46: #{tpu_custom_call.1} parent=1 // pred_region
      %274 = dma.done [#allocation10], 16
    $region47: #{tpu_custom_call.1} parent=1 // pred_fallthru
      _
    %275 = vsyncpa [#allocation10], 1
  %276 = vsyncmov [#allocation4]
  %s277 = vpop.sfrf %276
  %p278 = scmp.eq.s32.totalorder %s277, 0
  %p279 = pneg %p278
  %281 = shalt.err (%p279)
  %s282 = scalar_lea.sflag [#allocation4], 1
  %283 = vsyncmov %s282
  %s284 = vpop.sfrf %283
  %p285 = scmp.eq.s32.totalorder %s284, 0
  %p286 = pneg %p285
  %288 = shalt.err (%p286)

</llo_original>
